<compile_context>
chip_gen: v5e
topology: v5e:2x2
jax: 0.10.0
libtpu: 0.0.40
codegen_flags: <defaults>
</compile_context>

<pallas_src>
import functools

import jax
import jax.numpy as jnp
from jax.experimental import pallas as pl
from jax.experimental.pallas import tpu as pltpu


def _round_up(x: int, m: int) -> int:
    return ((x + m - 1) // m) * m


def _int_pow(x, n: int):
    """x**n for a static positive integer n via exponentiation-by-squaring,
    unrolled at trace time (stays on the VPU; no exp/log lowering)."""
    assert n >= 1
    result = None
    base = x
    while n > 0:
        if n & 1:
            result = base if result is None else result * base
        n >>= 1
        if n:
            base = base * base
    return result


def _poly_envelope_kernel(d_ref, o_ref, *, p, a, b, c):
    # d_ref / o_ref: (TILE_ROWS, LANES)
    d = d_ref[...]                                   # float32
    d_p = _int_pow(d, p)                             # d^p, multiplies only
    # Horner form of  1 + a*d^p + b*d^(p+1) + c*d^(p+2)
    env = 1.0 + d_p * (a + d * (b + c * d))
    env = jnp.where(d < 1.0, env, jnp.zeros_like(env))
    o_ref[...] = env.astype(o_ref.dtype)


def polynomial_envelope(d_scaled, *, exponent: int = 5, out_dtype=None,
                        lanes: int = 512, max_tile_rows: int = 1024):
    """Pallas implementation of PolynomialEnvelope.forward.

    d_scaled: array of any shape (distances already divided by the cutoff).
    returns:  array of the same shape with the smooth-cutoff envelope applied.
    """
    assert exponent > 0
    d = jnp.asarray(d_scaled, jnp.float32)
    out_dtype = d.dtype if out_dtype is None else out_dtype
    orig_shape = d.shape
    n = int(d.size)

    p = float(exponent)
    a = -(p + 1.0) * (p + 2.0) / 2.0
    b = p * (p + 2.0)
    c = -p * (p + 1.0) / 2.0

    # Flatten -> (rows_pad, lanes).  lanes is a multiple of 128 (lane-dense,
    # unmasked stores); rows are tiled in large 8-aligned chunks.
    rows = max(pl.cdiv(n, lanes), 1)
    tile_rows = min(max_tile_rows, _round_up(rows, 8))
    rows_pad = _round_up(rows, tile_rows)
    n_pad = rows_pad * lanes

    # Zero-padding is harmless: padded outputs (env(0)=1) are sliced off below.
    flat = jnp.pad(d.reshape(-1), (0, n_pad - n))
    x2d = flat.reshape(rows_pad, lanes)

    kernel = functools.partial(_poly_envelope_kernel, p=exponent, a=a, b=b, c=c)

    out2d = pl.pallas_call(
        kernel,
        out_shape=jax.ShapeDtypeStruct((rows_pad, lanes), out_dtype),
        grid=(rows_pad // tile_rows,),
        in_specs=[pl.BlockSpec((tile_rows, lanes), lambda i: (i, 0))],
        out_specs=pl.BlockSpec((tile_rows, lanes), lambda i: (i, 0)),
        compiler_params=pltpu.CompilerParams(
            dimension_semantics=("parallel",)),
    )(x2d)

    return out2d.reshape(-1)[:n].reshape(orig_shape)


def polynomial_envelope_reference(d_scaled, *, exponent: int = 5):
    """Pure-JAX reference mirroring the PyTorch forward."""
    d = jnp.asarray(d_scaled, jnp.float32)
    p = float(exponent)
    a = -(p + 1.0) * (p + 2.0) / 2.0
    b = p * (p + 2.0)
    c = -p * (p + 1.0) / 2.0
    env = 1.0 + a * d ** exponent + b * d ** (exponent + 1) + c * d ** (exponent + 2)
    return jnp.where(d < 1.0, env, jnp.zeros_like(d))


if __name__ == "__main__":
    key = jax.random.PRNGKey(0)
    num_edges = 512
    # Scaled distances in [0, 1.5): some exceed 1 so the where-branch is exercised.
    d_scaled = jax.random.uniform(key, (num_edges,), jnp.float32,
                                  minval=0.0, maxval=1.5)

    out = polynomial_envelope(d_scaled, exponent=5)
    out = jax.block_until_ready(out)

    ref = polynomial_envelope_reference(d_scaled, exponent=5)
    assert out.shape == d_scaled.shape
    assert out.dtype == d_scaled.dtype
    assert jnp.allclose(out, ref, atol=1e-5, rtol=1e-5), \
        float(jnp.max(jnp.abs(out - ref)))

    # The torch module is shape-agnostic; also check a 2-D, non-aligned shape.
    d2 = jax.random.uniform(jax.random.PRNGKey(1), (8, 96), jnp.float32,
                            minval=0.0, maxval=1.2)
    out2 = jax.block_until_ready(polynomial_envelope(d2, exponent=5))
    ref2 = polynomial_envelope_reference(d2, exponent=5)
    assert jnp.allclose(out2, ref2, atol=1e-5, rtol=1e-5)

    print("KERNEL_OK")
</pallas_src>

<mosaic_0001>
module attributes {stable_mosaic.version = 11 : i64} {
  func.func @_poly_envelope_kernel(%arg0: i32, %arg1: memref<8x512xf32, #tpu.memory_space<vmem>>, %arg2: memref<8x512xf32, #tpu.memory_space<vmem>>) attributes {dimension_semantics = [#tpu.dimension_semantics<parallel>], iteration_bounds = array<i64: 1>, scalar_prefetch = 0 : i64, scratch_operands = 0 : i64, tpu.core_type = #tpu.core_type<tc>, window_params = [{transform_indices = @transform_0, window_bounds = array<i64: 8, 512>}, {transform_indices = @transform_1, window_bounds = array<i64: 8, 512>}]} {
    %c0 = arith.constant 0 : index
    %c0_0 = arith.constant 0 : index
    %0 = vector.load %arg1[%c0, %c0_0] : memref<8x512xf32, #tpu.memory_space<vmem>>, vector<8x512xf32>
    %1 = arith.mulf %0, %0 : vector<8x512xf32>
    %2 = arith.mulf %1, %1 : vector<8x512xf32>
    %3 = arith.mulf %0, %2 : vector<8x512xf32>
    %cst = arith.constant -1.500000e+01 : f32
    %4 = vector.broadcast %cst : f32 to vector<8x512xf32>
    %5 = arith.mulf %4, %0 : vector<8x512xf32>
    %cst_1 = arith.constant 3.500000e+01 : f32
    %6 = vector.broadcast %cst_1 : f32 to vector<8x512xf32>
    %7 = arith.addf %6, %5 : vector<8x512xf32>
    %8 = arith.mulf %0, %7 : vector<8x512xf32>
    %cst_2 = arith.constant -2.100000e+01 : f32
    %9 = vector.broadcast %cst_2 : f32 to vector<8x512xf32>
    %10 = arith.addf %9, %8 : vector<8x512xf32>
    %11 = arith.mulf %3, %10 : vector<8x512xf32>
    %cst_3 = arith.constant 1.000000e+00 : f32
    %12 = vector.broadcast %cst_3 : f32 to vector<8x512xf32>
    %13 = arith.addf %12, %11 : vector<8x512xf32>
    %cst_4 = arith.constant 1.000000e+00 : f32
    %14 = vector.broadcast %cst_4 : f32 to vector<8x512xf32>
    %15 = arith.cmpf olt, %0, %14 : vector<8x512xf32>
    %cst_5 = arith.constant 0.000000e+00 : f32
    %16 = vector.broadcast %cst_5 : f32 to vector<8x512xf32>
    %17 = arith.select %15, %13, %16 : vector<8x512xi1>, vector<8x512xf32>
    %c0_6 = arith.constant 0 : index
    %c0_7 = arith.constant 0 : index
    %18 = vector.load %arg2[%c0_6, %c0_7] : memref<8x512xf32, #tpu.memory_space<vmem>>, vector<8x512xf32>
    tpu.vector_store %arg2[%c0_6, %c0_7], %17 {strides = array<i32>} : memref<8x512xf32, #tpu.memory_space<vmem>>, vector<8x512xf32>,
    return
  }
  func.func @transform_0(%arg0: i32) -> (i32, i32) {
    %c0_i32 = arith.constant 0 : i32
    %c0_i32_0 = arith.constant 0 : i32
    return %arg0, %c0_i32 : i32, i32
  }
  func.func @transform_1(%arg0: i32) -> (i32, i32) {
    %c0_i32 = arith.constant 0 : i32
    %c0_i32_0 = arith.constant 0 : i32
    return %arg0, %c0_i32 : i32, i32
  }
}

</mosaic_0001>

<llo_original>
// kernel: tpu_custom_call.1
$region0: #{tpu_custom_call.1}
  #allocation0 [shape = 'u32[]', space=smem, size = 0x4, offset = 0x4, fixed_abs, tag = 'smem constant byte address 0x4 - core index']
  #allocation1 [shape = 'u32[72,128]{1,0:T(1,128)}', space=vmem, size = 0x9000, scoped, tag = 'internal scratch']
  %s0 = inlined_call_operand.hbm [shape: f32[8,512], index: 0, kind: input, shape index: {}]
  %s1 = inlined_call_operand.hbm [shape: f32[8,512], index: 1, kind: output, shape index: {}]
  %s2 = sld [smem:[#allocation0]]
  $region18: #{tpu_custom_call.1} parent=0
    _
  %s4 = ssub.s32 1, %s2
  %s5 = scalar_select 0, %s4, %s2
  $region1: #{tpu_custom_call.1} parent=0
    #allocation2 [shape = 'u8[16384]{0}', space=vmem, size = 0x4000, scoped, tag = 'input window, operand 0, single buffered']
    #allocation3 [shape = 's32[1]{0}', space=sflag, size = 0x4, scoped, tag = 'scoped memory for tpu_custom_call.1']
    #allocation4 [shape = 's32[1]{0}', space=sflag, size = 0x4, scoped, tag = 'scoped memory for tpu_custom_call.1']
    #allocation5 [shape = 'u8[16384]{0}', space=vmem, size = 0x4000, scoped, tag = 'output window, operand 0, single buffered']
    %6 = vsyncpa [#allocation3], 0
    %7 = vsyncpa [#allocation4], 0
    // Predicated region
    $region2: #{tpu_custom_call.1} parent=1 // pred_check
      _
    $region3: #{tpu_custom_call.1} parent=1 // pred_check_branch
      %9 = sbr.rel (0) target = $region5
    $region4: #{tpu_custom_call.1} parent=1 // pred_region
      %11 = vsyncadd [#allocation3], 0
      %s13 = sshll.u32 %s0, 4
      %s14 = int_to_ptr.hbm [resolvable:$true] %s13
      %s15 = sshll.u32 [#allocation2], 4
      %s16 = int_to_ptr.vmem [resolvable:$true] %s15
      %18 = dma.hbm_to_vmem [thread:$0]  %s14, 512, %s16, [#allocation3]
    $region5: #{tpu_custom_call.1} parent=1 // pred_fallthru
      _
    // Predicated region
    $region6: #{tpu_custom_call.1} parent=1 // pred_check
      _
    $region7: #{tpu_custom_call.1} parent=1 // pred_check_branch
      %20 = sbr.rel (0) target = $region9
    $region8: #{tpu_custom_call.1} parent=1 // pred_region
      %22 = dma.done [#allocation3], 512
    $region9: #{tpu_custom_call.1} parent=1 // pred_fallthru
      _
    %v23 = vld [vmem:[#allocation2] sm:$0xff]
    %v24 = vld [vmem:[#allocation2 + $0x8] sm:$0xff]
    %v25 = vld [vmem:[#allocation2 + $0x10] sm:$0xff]
    %v26 = vld [vmem:[#allocation2 + $0x18] sm:$0xff]
    %v27 = vmul.f32 %v23, %v23
    %v28 = vmul.f32 %v24, %v24
    %v29 = vmul.f32 %v25, %v25
    %v30 = vmul.f32 %v26, %v26
    %v31 = vmul.f32 %v27, %v27
    %v32 = vmul.f32 %v28, %v28
    %v33 = vmul.f32 %v29, %v29
    %v34 = vmul.f32 %v30, %v30
    %v35 = vmul.f32 %v23, %v31
    %v36 = vmul.f32 %v24, %v32
    %v37 = vmul.f32 %v25, %v33
    %v38 = vmul.f32 %v26, %v34
    %v39 = vmul.f32 %v23, -15.0
    %v40 = vmul.f32 %v24, -15.0
    %v41 = vmul.f32 %v25, -15.0
    %v42 = vmul.f32 %v26, -15.0
    %v43 = vadd.f32 %v39, 35.0
    %v44 = vadd.f32 %v40, 35.0
    %v45 = vadd.f32 %v41, 35.0
    %v46 = vadd.f32 %v42, 35.0
    %v47 = vmul.f32 %v23, %v43
    %v48 = vmul.f32 %v24, %v44
    %v49 = vmul.f32 %v25, %v45
    %v50 = vmul.f32 %v26, %v46
    %v51 = vadd.f32 %v47, -21.0
    %v52 = vadd.f32 %v48, -21.0
    %v53 = vadd.f32 %v49, -21.0
    %v54 = vadd.f32 %v50, -21.0
    %v55 = vmul.f32 %v35, %v51
    %v56 = vmul.f32 %v36, %v52
    %v57 = vmul.f32 %v37, %v53
    %v58 = vmul.f32 %v38, %v54
    %v59 = vadd.f32 %v55, 1.0
    %v60 = vadd.f32 %v56, 1.0
    %v61 = vadd.f32 %v57, 1.0
    %v62 = vadd.f32 %v58, 1.0
    %vm63 = vcmp.lt.f32.partialorder %v23, 1.0
    %vm64 = vcmp.lt.f32.partialorder %v24, 1.0
    %vm65 = vcmp.lt.f32.partialorder %v25, 1.0
    %vm66 = vcmp.lt.f32.partialorder %v26, 1.0
    %v67 = vsel %vm63, %v59, 0.0
    %v68 = vsel %vm64, %v60, 0.0
    %v69 = vsel %vm65, %v61, 0.0
    %v70 = vsel %vm66, %v62, 0.0
    %71 = vst [vmem:[#allocation5] sm:$0xff] %v67
    %72 = vst [vmem:[#allocation5 + $0x8] sm:$0xff] %v68
    %73 = vst [vmem:[#allocation5 + $0x10] sm:$0xff] %v69
    %74 = vst [vmem:[#allocation5 + $0x18] sm:$0xff] %v70
    // Predicated region
    $region10: #{tpu_custom_call.1} parent=1 // pred_check
      _
    $region11: #{tpu_custom_call.1} parent=1 // pred_check_branch
      %76 = sbr.rel (0) target = $region13
    $region12: #{tpu_custom_call.1} parent=1 // pred_region
      %78 = vsyncadd [#allocation4], 0
      %s80 = sshll.u32 [#allocation5], 4
      %s81 = int_to_ptr.vmem [resolvable:$true] %s80
      %s82 = sshll.u32 %s1, 4
      %s83 = int_to_ptr.hbm [resolvable:$true] %s82
      %85 = dma.vmem_to_hbm [thread:$0]  %s81, 512, %s83, [#allocation4]
    $region13: #{tpu_custom_call.1} parent=1 // pred_fallthru
      _
    // Predicated region
    $region14: #{tpu_custom_call.1} parent=1 // pred_check
      _
    $region15: #{tpu_custom_call.1} parent=1 // pred_check_branch
      %87 = sbr.rel (0) target = $region17
    $region16: #{tpu_custom_call.1} parent=1 // pred_region
      %89 = dma.done [#allocation4], 512
    $region17: #{tpu_custom_call.1} parent=1 // pred_fallthru
      _
    %90 = vsyncpa [#allocation3], 1
    %91 = vsyncpa [#allocation4], 1

</llo_original>
